<compile_context>
chip_gen: v5e
topology: v5e:2x2
jax: 0.10.0
libtpu: 0.0.40
codegen_flags: <defaults>
</compile_context>

<pallas_src>
import functools
import math

import jax
import jax.numpy as jnp
from jax import lax
from jax.experimental import pallas as pl
from jax.experimental.pallas import tpu as pltpu

_LANE = 128
_MAX_UNROLL = 64


def _cdiv(a: int, b: int) -> int:
    return -(-a // b)


def _round_up(v: int, m: int) -> int:
    return _cdiv(v, m) * m


def round_channels(channels, divisor: int = 8) -> int:
    rounded = max(int(channels + divisor / 2.0) // divisor * divisor, divisor)
    if float(rounded) < 0.9 * channels:
        rounded += divisor
    return rounded


def _tpu_generation():
    """Best-effort TPU generation (7, 6, 5, 4) from device_kind; None if unknown."""
    try:
        kind = jax.devices()[0].device_kind.lower()
    except Exception:
        return None
    for g in (7, 6, 5, 4):
        if (f"v{g}" in kind) or (f"tpu{g}" in kind) or (f"tpu {g}" in kind):
            return g
    return None


# Activations supported by create_activation_layer (applied only to tiny
# (1, mid) / (C, 1) tensors inside the kernels -> negligible cost).
_ACTIVATIONS = {
    "relu": lambda v: jnp.maximum(v, 0.0),
    "relu6": lambda v: jnp.clip(v, 0.0, 6.0),
    "sigmoid": jax.nn.sigmoid,
    "hsigmoid": lambda v: jnp.clip(v + 3.0, 0.0, 6.0) * (1.0 / 6.0),
    "swish": lambda v: v * jax.nn.sigmoid(v),
    "hswish": lambda v: v * jnp.clip(v + 3.0, 0.0, 6.0) * (1.0 / 6.0),
    "identity": lambda v: v,
}


def _excite(mean_col, w1t_ref, b1_ref, w2_ref, b2_ref, mid_act, out_act):
    """Tiny excitation MLP: (C,1) mean -> (C,1) gate, all f32 on VPU/XLU."""
    h = jnp.sum(w1t_ref[...] * mean_col, axis=0, keepdims=True) + b1_ref[...]   # (1, mid)
    h = mid_act(h)
    g = jnp.sum(w2_ref[...] * h, axis=-1, keepdims=True) + b2_ref[...]          # (C, 1)
    return out_act(g)                                                            # (C, 1) f32


# --------------------------------------------------------------------------
# Fused single-pass kernel: mean + excitation MLP + gating on one VMEM slab.
# --------------------------------------------------------------------------
def _se_fused_kernel(hw, inv_hw, mid_act, out_act, native_gate,
                     x_ref, w1t_ref, b1_ref, w2_ref, b2_ref, o_ref):
    # x_ref / o_ref : (1, C, hw)  -- full spatial slab of one batch element.
    xt = x_ref[0]                                                     # (C, hw)

    n_chunks = hw // _LANE
    if hw % _LANE == 0 and 1 < n_chunks <= _MAX_UNROLL:
        # Wide VALU accumulation; single cross-lane reduce at the end.
        s = xt[:, 0:_LANE].astype(jnp.float32)
        for i in range(1, n_chunks):
            s = s + xt[:, i * _LANE:(i + 1) * _LANE].astype(jnp.float32)
        mean_col = jnp.sum(s, axis=-1, keepdims=True) * inv_hw        # (C, 1)
    else:
        mean_col = jnp.sum(xt.astype(jnp.float32), axis=-1, keepdims=True) * inv_hw

    g = _excite(mean_col, w1t_ref, b1_ref, w2_ref, b2_ref, mid_act, out_act)

    if native_gate:
        o_ref[0] = xt * g.astype(xt.dtype)
    else:
        o_ref[0] = (xt.astype(jnp.float32) * g).astype(o_ref.dtype)


# --------------------------------------------------------------------------
# Two-pass kernel 1: blocked squeeze (wide accumulator) + excitation epilogue.
# --------------------------------------------------------------------------
def _se_gate_kernel(hw, inv_hw, hw_tile, ragged, mid_act, out_act,
                    x_ref, w1t_ref, b1_ref, w2_ref, b2_ref,
                    gate_ref, acc_ref):
    # x_ref    : (1, C, hw_tile)   current spatial tile of one batch element
    # w1t_ref  : (C, mid)   b1_ref : (1, mid)   w2_ref : (C, mid)   b2_ref : (C, 1)
    # gate_ref : (1, C, 1) f32 (written at last step)
    # acc_ref  : (C, 128) f32 running wide accumulator (VMEM scratch)
    t = pl.program_id(1)

    @pl.when(t == 0)
    def _():
        acc_ref[...] = jnp.zeros_like(acc_ref)

    base = t * hw_tile
    n_chunks = hw_tile // _LANE

    def chunk_at(off):
        c = x_ref[0, :, pl.ds(off, _LANE)].astype(jnp.float32)        # (C, 128)
        if ragged:
            lane = lax.broadcasted_iota(jnp.int32, c.shape, 1)
            c = jnp.where(base + off + lane < hw, c, 0.0)
        return c

    if n_chunks <= _MAX_UNROLL:
        acc = acc_ref[...]
        for i in range(n_chunks):
            acc = acc + chunk_at(i * _LANE)
        acc_ref[...] = acc
    else:
        def body(i, carry):
            off = pl.multiple_of(i * _LANE, _LANE)
            acc_ref[...] += chunk_at(off)
            return carry
        lax.fori_loop(0, n_chunks, body, 0)

    @pl.when(t == pl.num_programs(1) - 1)
    def _():
        mean_col = jnp.sum(acc_ref[...], axis=-1, keepdims=True) * inv_hw   # (C, 1)
        g = _excite(mean_col, w1t_ref, b1_ref, w2_ref, b2_ref, mid_act, out_act)
        gate_ref[...] = g[None].astype(gate_ref.dtype)


# --------------------------------------------------------------------------
# Two-pass kernel 2: apply gate  y[n, c, :] = x[n, c, :] * gate[n, c]
# --------------------------------------------------------------------------
def _se_scale_kernel(native_gate, x_ref, gate_ref, o_ref):
    # x_ref: (1, C, hw_tile), gate_ref: (1, C, 1) f32.  Ragged final tile's
    # invalid lanes read garbage but their stores are masked by Pallas.
    xt = x_ref[0]
    if native_gate:
        o_ref[0] = xt * gate_ref[0].astype(xt.dtype)
    else:
        o_ref[0] = (xt.astype(jnp.float32) * gate_ref[0]).astype(o_ref.dtype)


# --------------------------------------------------------------------------
# Wrapper
# --------------------------------------------------------------------------
def se_block(x, w1, b1, w2, b2,
             mid_activation: str = "relu",
             out_activation: str = "sigmoid",
             *, force_two_pass: bool = False,
             max_block_bytes: int | None = None,
             vmem_limit_bytes: int | None = None):
    """SEBlock forward. x: (N, C, H, W). w1: (mid, C), b1: (mid,), w2: (C, mid), b2: (C,)."""
    N, C, H, W = x.shape
    mid = w1.shape[0]
    hw = H * W
    itemsize = jnp.dtype(x.dtype).itemsize

    gen = _tpu_generation()
    if gen is not None and gen <= 6:
        # v5e / v6e: 128 MiB physical VMEM -> big blocks, deep pipeline.
        block_bytes = max_block_bytes if max_block_bytes is not None else (8 << 20)
        vmem_limit = vmem_limit_bytes if vmem_limit_bytes is not None else (96 << 20)
    else:
        # v7x (64 MiB VMEM) or unknown -> conservative.
        block_bytes = max_block_bytes if max_block_bytes is not None else (4 << 20)
        vmem_limit = vmem_limit_bytes if vmem_limit_bytes is not None else (48 << 20)

    mid_act = _ACTIVATIONS[mid_activation]
    out_act = _ACTIVATIONS[out_activation]
    # Native-dtype gating only where the VPU has sub-f32 support (v6e/v7x);
    # f32 inputs are unaffected either way.
    native_gate = (jnp.dtype(x.dtype) != jnp.dtype(jnp.float32)) and (gen is not None and gen >= 6)

    # Free layout-only reshape (no pad, no copy).
    x2 = x.reshape(N, C, hw)

    # Tiny excitation parameters, pre-laid-out once (avoids in-kernel transposes).
    w1t = jnp.transpose(w1).astype(jnp.float32)        # (C, mid)
    b1r = b1.reshape(1, mid).astype(jnp.float32)       # (1, mid)
    w2f = w2.astype(jnp.float32)                       # (C, mid)
    b2c = b2.reshape(C, 1).astype(jnp.float32)         # (C, 1)
    inv_hw = 1.0 / float(hw)

    param_specs = [
        pl.BlockSpec((C, mid), lambda *idx: (0, 0)),
        pl.BlockSpec((1, mid), lambda *idx: (0, 0)),
        pl.BlockSpec((C, mid), lambda *idx: (0, 0)),
        pl.BlockSpec((C, 1), lambda *idx: (0, 0)),
    ]

    # ---------------- fused single-pass path ----------------
    slab_bytes = C * hw * itemsize
    # resident ~ 2x in + 2x out double buffers (+ f32 working copy for narrow dtypes)
    mult = 4 + max(1, 4 // itemsize)
    param_bytes = 2 * C * mid * 4 + (C + mid) * 4
    fused_ok = (not force_two_pass) and \
        (slab_bytes * mult + param_bytes <= int(vmem_limit * 0.9))

    if fused_ok:
        y = pl.pallas_call(
            functools.partial(_se_fused_kernel, hw, inv_hw, mid_act, out_act, native_gate),
            out_shape=jax.ShapeDtypeStruct((N, C, hw), x.dtype),
            grid=(N,),
            in_specs=[pl.BlockSpec((1, C, hw), lambda n: (n, 0, 0))] + param_specs,
            out_specs=pl.BlockSpec((1, C, hw), lambda n: (n, 0, 0)),
            compiler_params=pltpu.CompilerParams(
                dimension_semantics=("parallel",),
                vmem_limit_bytes=vmem_limit),
        )(x2, w1t, b1r, w2f, b2c)
        return y.reshape(N, C, H, W)

    # ---------------- two-pass path (large slabs) ----------------
    # Biggest lane-multiple hw tile that keeps a (C, hw_tile) block under budget.
    cap = max(_LANE, (block_bytes // max(1, C * itemsize)) // _LANE * _LANE)
    n_tiles = _cdiv(hw, cap)
    hw_tile = min(_round_up(_cdiv(hw, n_tiles), _LANE), _round_up(hw, _LANE))
    n_tiles = _cdiv(hw, hw_tile)
    ragged = (hw % hw_tile) != 0

    gate = pl.pallas_call(
        functools.partial(_se_gate_kernel, hw, inv_hw, hw_tile, ragged, mid_act, out_act),
        out_shape=jax.ShapeDtypeStruct((N, C, 1), jnp.float32),
        grid=(N, n_tiles),
        in_specs=[pl.BlockSpec((1, C, hw_tile), lambda n, t: (n, 0, t))] + param_specs,
        out_specs=pl.BlockSpec((1, C, 1), lambda n, t: (n, 0, 0)),
        scratch_shapes=[pltpu.VMEM((C, _LANE), jnp.float32)],
        compiler_params=pltpu.CompilerParams(
            dimension_semantics=("parallel", "arbitrary"),
            vmem_limit_bytes=vmem_limit),
    )(x2, w1t, b1r, w2f, b2c)

    y = pl.pallas_call(
        functools.partial(_se_scale_kernel, native_gate),
        out_shape=jax.ShapeDtypeStruct((N, C, hw), x.dtype),
        grid=(N, n_tiles),
        in_specs=[
            pl.BlockSpec((1, C, hw_tile), lambda n, t: (n, 0, t)),
            pl.BlockSpec((1, C, 1), lambda n, t: (n, 0, 0)),
        ],
        out_specs=pl.BlockSpec((1, C, hw_tile), lambda n, t: (n, 0, t)),
        compiler_params=pltpu.CompilerParams(
            dimension_semantics=("parallel", "parallel"),
            vmem_limit_bytes=vmem_limit),
    )(x2, gate)

    return y.reshape(N, C, H, W)


class SEBlock:
    """JAX/Pallas mirror of pytorchcv's SEBlock (use_conv and fc variants are
    mathematically identical for a 1x1 spatial map, so one code path serves both)."""

    def __init__(self, channels, reduction=16, mid_channels=None, round_mid=False,
                 use_conv=True, mid_activation="relu", out_activation="sigmoid",
                 *, key=None, dtype=jnp.float32):
        if mid_channels is None:
            mid_channels = (channels // reduction) if not round_mid else \
                round_channels(float(channels) / reduction)
        if mid_channels < 1:
            raise ValueError("mid_channels must be >= 1 (pick a smaller reduction)")
        self.channels = int(channels)
        self.mid_channels = int(mid_channels)
        self.use_conv = use_conv
        self.mid_activation = mid_activation
        self.out_activation = out_activation

        if key is None:
            key = jax.random.PRNGKey(0)
        k1, k2, k3, k4 = jax.random.split(key, 4)
        bound1 = 1.0 / math.sqrt(channels)
        bound2 = 1.0 / math.sqrt(mid_channels)
        self.w1 = jax.random.uniform(k1, (self.mid_channels, self.channels), dtype, -bound1, bound1)
        self.b1 = jax.random.uniform(k2, (self.mid_channels,), dtype, -bound1, bound1)
        self.w2 = jax.random.uniform(k3, (self.channels, self.mid_channels), dtype, -bound2, bound2)
        self.b2 = jax.random.uniform(k4, (self.channels,), dtype, -bound2, bound2)

    def __call__(self, x, **kwargs):
        return se_block(x, self.w1, self.b1, self.w2, self.b2,
                        self.mid_activation, self.out_activation, **kwargs)


def _reference_se_block(x, w1, b1, w2, b2, mid_act="relu", out_act="sigmoid"):
    xf = x.astype(jnp.float32)
    mean = xf.mean(axis=(2, 3))                                              # (N, C)
    h = mean @ w1.astype(jnp.float32).T + b1.astype(jnp.float32)             # (N, mid)
    h = _ACTIVATIONS[mid_act](h)
    g = h @ w2.astype(jnp.float32).T + b2.astype(jnp.float32)                # (N, C)
    g = _ACTIVATIONS[out_act](g)
    return (xf * g[:, :, None, None]).astype(x.dtype)


if __name__ == "__main__":
    key = jax.random.PRNGKey(0)
    kx, kx2, kp = jax.random.split(key, 3)

    C, reduction = 32, 8  # -> mid_channels = 4
    mod = SEBlock(channels=C, reduction=reduction, key=kp)

    # Case A: fused single-pass path (slab fits VMEM), 128-aligned hw.
    xa = jax.random.normal(kx, (2, C, 16, 16), dtype=jnp.float32)
    ya = jax.block_until_ready(mod(xa))
    ya_ref = _reference_se_block(xa, mod.w1, mod.b1, mod.w2, mod.b2,
                                 mod.mid_activation, mod.out_activation)
    assert ya.shape == xa.shape and ya.dtype == xa.dtype
    err_a = float(jnp.max(jnp.abs(ya.astype(jnp.float32) - ya_ref.astype(jnp.float32))))
    assert err_a < 1e-4, f"fused-path mismatch (max abs err {err_a})"

    # Case B: forced two-pass path with tiny blocks -> multiple ragged hw tiles
    # (hw = 225, tile = 128) exercising the masked reduction + masked stores.
    xb = jax.random.normal(kx2, (2, C, 15, 15), dtype=jnp.float32)
    yb = jax.block_until_ready(mod(xb, force_two_pass=True, max_block_bytes=16 * 1024))
    yb_ref = _reference_se_block(xb, mod.w1, mod.b1, mod.w2, mod.b2,
                                 mod.mid_activation, mod.out_activation)
    assert yb.shape == xb.shape and yb.dtype == xb.dtype
    err_b = float(jnp.max(jnp.abs(yb.astype(jnp.float32) - yb_ref.astype(jnp.float32))))
    assert err_b < 1e-4, f"two-pass-path mismatch (max abs err {err_b})"

    print("KERNEL_OK")
</pallas_src>

<mosaic_0001>
module attributes {stable_mosaic.version = 11 : i64} {
  func.func @_se_fused_kernel(%arg0: i32, %arg1: memref<1x32x256xf32, #tpu.memory_space<vmem>>, %arg2: memref<32x4xf32, #tpu.memory_space<vmem>>, %arg3: memref<1x4xf32, #tpu.memory_space<vmem>>, %arg4: memref<32x4xf32, #tpu.memory_space<vmem>>, %arg5: memref<32x1xf32, #tpu.memory_space<vmem>>, %arg6: memref<1x32x256xf32, #tpu.memory_space<vmem>>) attributes {dimension_semantics = [#tpu.dimension_semantics<parallel>], iteration_bounds = array<i64: 2>, scalar_prefetch = 0 : i64, scratch_operands = 0 : i64, tpu.core_type = #tpu.core_type<tc>, window_params = [{transform_indices = @transform_0, window_bounds = array<i64: 1, 32, 256>}, {pipeline_mode = #tpu.pipeline_mode<synchronous>, transform_indices = @transform_1, window_bounds = array<i64: 32, 4>}, {pipeline_mode = #tpu.pipeline_mode<synchronous>, transform_indices = @transform_2, window_bounds = array<i64: 1, 4>}, {pipeline_mode = #tpu.pipeline_mode<synchronous>, transform_indices = @transform_3, window_bounds = array<i64: 32, 4>}, {pipeline_mode = #tpu.pipeline_mode<synchronous>, transform_indices = @transform_4, window_bounds = array<i64: 32, 1>}, {transform_indices = @transform_5, window_bounds = array<i64: 1, 32, 256>}]} {
    %c0 = arith.constant 0 : index
    %c0_0 = arith.constant 0 : index
    %c0_1 = arith.constant 0 : index
    %0 = vector.load %arg1[%c0, %c0_0, %c0_1] : memref<1x32x256xf32, #tpu.memory_space<vmem>>, vector<1x32x256xf32>
    %1 = vector.shape_cast %0 : vector<1x32x256xf32> to vector<32x256xf32>
    %2 = vector.extract_strided_slice %1 {offsets = [0, 0], sizes = [32, 128], strides = [1, 1]} : vector<32x256xf32> to vector<32x128xf32>
    %3 = vector.extract_strided_slice %1 {offsets = [0, 128], sizes = [32, 128], strides = [1, 1]} : vector<32x256xf32> to vector<32x128xf32>
    %4 = arith.addf %2, %3 : vector<32x128xf32>
    %cst = arith.constant dense<0.000000e+00> : vector<32xf32>
    %5 = vector.multi_reduction <add>, %4, %cst [1] : vector<32x128xf32> to vector<32xf32>
    %6 = vector.shape_cast %5 : vector<32xf32> to vector<32x1xf32>
    %cst_2 = arith.constant 3.906250e-03 : f32
    %7 = vector.broadcast %cst_2 : f32 to vector<32x1xf32>
    %8 = arith.mulf %6, %7 : vector<32x1xf32>
    %c0_3 = arith.constant 0 : index
    %c0_4 = arith.constant 0 : index
    %9 = vector.load %arg2[%c0_3, %c0_4] : memref<32x4xf32, #tpu.memory_space<vmem>>, vector<32x4xf32>
    %10 = vector.broadcast %8 : vector<32x1xf32> to vector<32x4xf32>
    %11 = arith.mulf %9, %10 : vector<32x4xf32>
    %cst_5 = arith.constant dense<0.000000e+00> : vector<4xf32>
    %12 = vector.multi_reduction <add>, %11, %cst_5 [0] : vector<32x4xf32> to vector<4xf32>
    %13 = vector.shape_cast %12 : vector<4xf32> to vector<1x4xf32>
    %c0_6 = arith.constant 0 : index
    %c0_7 = arith.constant 0 : index
    %14 = vector.load %arg3[%c0_6, %c0_7] : memref<1x4xf32, #tpu.memory_space<vmem>>, vector<1x4xf32>
    %15 = arith.addf %13, %14 : vector<1x4xf32>
    %cst_8 = arith.constant 0.000000e+00 : f32
    %16 = vector.broadcast %cst_8 : f32 to vector<1x4xf32>
    %17 = arith.maximumf %15, %16 : vector<1x4xf32>
    %c0_9 = arith.constant 0 : index
    %c0_10 = arith.constant 0 : index
    %18 = vector.load %arg4[%c0_9, %c0_10] : memref<32x4xf32, #tpu.memory_space<vmem>>, vector<32x4xf32>
    %19 = vector.broadcast %17 : vector<1x4xf32> to vector<32x4xf32>
    %20 = arith.mulf %18, %19 : vector<32x4xf32>
    %cst_11 = arith.constant dense<0.000000e+00> : vector<32xf32>
    %21 = vector.multi_reduction <add>, %20, %cst_11 [1] : vector<32x4xf32> to vector<32xf32>
    %22 = vector.shape_cast %21 : vector<32xf32> to vector<32x1xf32>
    %c0_12 = arith.constant 0 : index
    %c0_13 = arith.constant 0 : index
    %23 = vector.load %arg5[%c0_12, %c0_13] : memref<32x1xf32, #tpu.memory_space<vmem>>, vector<32x1xf32>
    %24 = arith.addf %22, %23 : vector<32x1xf32>
    %25 = arith.negf %24 : vector<32x1xf32>
    %26 = math.exp %25 : vector<32x1xf32>
    %cst_14 = arith.constant 1.000000e+00 : f32
    %27 = vector.broadcast %cst_14 : f32 to vector<32x1xf32>
    %28 = arith.addf %27, %26 : vector<32x1xf32>
    %29 = arith.divf %27, %28 : vector<32x1xf32>
    %30 = vector.broadcast %29 : vector<32x1xf32> to vector<32x256xf32>
    %31 = arith.mulf %1, %30 : vector<32x256xf32>
    %c0_15 = arith.constant 0 : index
    %c0_16 = arith.constant 0 : index
    %c0_17 = arith.constant 0 : index
    %32 = vector.load %arg6[%c0_15, %c0_16, %c0_17] : memref<1x32x256xf32, #tpu.memory_space<vmem>>, vector<1x32x256xf32>
    %33 = vector.shape_cast %32 : vector<1x32x256xf32> to vector<32x256xf32>
    %34 = vector.shape_cast %31 : vector<32x256xf32> to vector<1x32x256xf32>
    tpu.vector_store %arg6[%c0_15, %c0_16, %c0_17], %34 {strides = array<i32>} : memref<1x32x256xf32, #tpu.memory_space<vmem>>, vector<1x32x256xf32>,
    return
  }
  func.func @transform_0(%arg0: i32) -> (i32, i32, i32) {
    %c0_i32 = arith.constant 0 : i32
    %c0_i32_0 = arith.constant 0 : i32
    %c0_i32_1 = arith.constant 0 : i32
    return %arg0, %c0_i32, %c0_i32_0 : i32, i32, i32
  }
  func.func @transform_1(%arg0: i32) -> (i32, i32) {
    %c0_i32 = arith.constant 0 : i32
    %c0_i32_0 = arith.constant 0 : i32
    %c0_i32_1 = arith.constant 0 : i32
    return %c0_i32, %c0_i32_0 : i32, i32
  }
  func.func @transform_2(%arg0: i32) -> (i32, i32) {
    %c0_i32 = arith.constant 0 : i32
    %c0_i32_0 = arith.constant 0 : i32
    %c0_i32_1 = arith.constant 0 : i32
    return %c0_i32, %c0_i32_0 : i32, i32
  }
  func.func @transform_3(%arg0: i32) -> (i32, i32) {
    %c0_i32 = arith.constant 0 : i32
    %c0_i32_0 = arith.constant 0 : i32
    %c0_i32_1 = arith.constant 0 : i32
    return %c0_i32, %c0_i32_0 : i32, i32
  }
  func.func @transform_4(%arg0: i32) -> (i32, i32) {
    %c0_i32 = arith.constant 0 : i32
    %c0_i32_0 = arith.constant 0 : i32
    %c0_i32_1 = arith.constant 0 : i32
    return %c0_i32, %c0_i32_0 : i32, i32
  }
  func.func @transform_5(%arg0: i32) -> (i32, i32, i32) {
    %c0_i32 = arith.constant 0 : i32
    %c0_i32_0 = arith.constant 0 : i32
    %c0_i32_1 = arith.constant 0 : i32
    return %arg0, %c0_i32, %c0_i32_0 : i32, i32, i32
  }
}

</mosaic_0001>

<llo_original>
// kernel: tpu_custom_call.1
$region0: #{tpu_custom_call.1}
  #allocation0 [shape = 'u32[]', space=smem, size = 0x4, offset = 0x4, fixed_abs, tag = 'smem constant byte address 0x4 - core index']
  #allocation1 [shape = 'u32[72,128]{1,0:T(1,128)}', space=vmem, size = 0x9000, scoped, tag = 'internal scratch']
  %s0 = inlined_call_operand.hbm [shape: f32[2,32,256], index: 0, kind: input, shape index: {}]
  %s1 = inlined_call_operand.vmem [shape: f32[32,4], index: 1, kind: input, shape index: {}]
  %s2 = inlined_call_operand.vmem [shape: f32[1,4], index: 2, kind: input, shape index: {}]
  %s3 = inlined_call_operand.vmem [shape: f32[32,4], index: 3, kind: input, shape index: {}]
  %s4 = inlined_call_operand.vmem [shape: f32[32,1], index: 4, kind: input, shape index: {}]
  %s5 = inlined_call_operand.hbm [shape: f32[2,32,256], index: 5, kind: output, shape index: {}]
  %s6 = sld [smem:[#allocation0]]
  $region57: #{tpu_custom_call.1} parent=0
    _
  %s8 = ssub.s32 1, %s6
  %s9 = scalar_select 0, %s8, %s6
  $region1: #{tpu_custom_call.1} parent=0
    #allocation2 [shape = 'u8[65536]{0}', space=vmem, size = 0x10000, scoped, tag = 'input window, operand 0']
    #allocation3 [shape = 's32[2]{0}', space=sflag, size = 0x8, scoped, tag = 'scoped memory for tpu_custom_call.1']
    #allocation4 [shape = 's32[2]{0}', space=sflag, size = 0x8, scoped, tag = 'scoped memory for tpu_custom_call.1']
    #allocation5 [shape = 'u8[65536]{0}', space=vmem, size = 0x10000, scoped, tag = 'output window, operand 0']
    %10 = vsyncpa [#allocation3], 0
    %s11 = scalar_lea.sflag [#allocation3], 1
    %12 = vsyncpa %s11, 0
    %13 = vsyncpa [#allocation4], 0
    %s14 = scalar_lea.sflag [#allocation4], 1
    %15 = vsyncpa %s14, 0
    loop: start=0, step=1, limit=4
    $region2: #{tpu_custom_call.1} parent=1 // loop_pre_header
      _
    $region3: #{tpu_custom_call.1} parent=1 // loop_header
      %s17 = sphi 0, %s21
      %p18 = scmp.ge.s32.totalorder %s17, 4
      %s27 = sphi 0, %s29
      %s30 = sphi 0, %s27
      %s31 = sphi 0, %s30
      %s47 = sphi 0, %s31
      %s51 = sphi 0, %s51
      %s53 = sphi 0, %s51
      %s54 = sphi 0, %s53
      %s68 = sphi 0, %s54
      %s72 = sphi 0, %s72
      %s74 = sphi 0, %s72
      %s75 = sphi 0, %s74
      %s89 = sphi 0, %s75
      %s93 = sphi 0, %s93
      %s95 = sphi 0, %s93
      %s96 = sphi 0, %s95
      %s110 = sphi 0, %s96
      %s114 = sphi 0, %s114
      %s116 = sphi 0, %s114
      %s117 = sphi 0, %s116
      %s131 = sphi 0, %s117
      %s137 = sphi 0, %s139
      %s140 = sphi 0, %s137
      %s141 = sphi 0, %s140
      %s157 = sphi 0, %s141
    $region4: #{tpu_custom_call.1} parent=1 // loop_header_branch
      %20 = sbr.rel (%p18) target = $region8
    $region5: #{tpu_custom_call.1} parent=1 // loop_body
      %s22 = ssub.s32 %s17, 1
      %s23 = ssub.s32 %s17, 2
      %s24 = sadd.s32 %s17, 1
      %s25 = ssub.s32 %s17, %s24
      %p26 = scmp.eq.s32.totalorder %s25, 0
      %s28 = sadd.s32 %s27, 1
      %s29 = scalar_select %p26, %s27, %s28
      %p32 = pneg %p26
      %p33 = scmp.eq.s32.totalorder %s17, 1
      %p34 = por %p32, %p33
      %p35 = scmp.ne.s32.totalorder %s27, %s30
      %p36 = scmp.eq.s32.totalorder %s17, 0
      %p37 = por %p35, %p36
      %p38 = scmp.ne.s32.totalorder %s27, %s30
      %p39 = scmp.eq.s32.totalorder %s22, 1
      %p40 = por %p38, %p39
      %p41 = scmp.ne.s32.totalorder %s30, %s31
      %p42 = scmp.eq.s32.totalorder %s22, 0
      %p43 = por %p41, %p42
      %p44 = scmp.ne.s32.totalorder %s30, %s31
      %p45 = scmp.eq.s32.totalorder %s23, 1
      %p46 = por %p44, %p45
      %p48 = scmp.ne.s32.totalorder %s31, %s47
      %p49 = scmp.eq.s32.totalorder %s23, 0
      %p50 = por %p48, %p49
      %s52 = sadd.s32 %s51, 1
      %p55 = scmp.eq.s32.totalorder %s17, 1
      %p56 = scmp.ne.s32.totalorder %s51, %s53
      %p57 = scmp.eq.s32.totalorder %s17, 0
      %p58 = por %p56, %p57
      %p59 = scmp.ne.s32.totalorder %s51, %s53
      %p60 = scmp.eq.s32.totalorder %s22, 1
      %p61 = por %p59, %p60
      %p62 = scmp.ne.s32.totalorder %s53, %s54
      %p63 = scmp.eq.s32.totalorder %s22, 0
      %p64 = por %p62, %p63
      %p65 = scmp.ne.s32.totalorder %s53, %s54
      %p66 = scmp.eq.s32.totalorder %s23, 1
      %p67 = por %p65, %p66
      %p69 = scmp.ne.s32.totalorder %s54, %s68
      %p70 = scmp.eq.s32.totalorder %s23, 0
      %p71 = por %p69, %p70
      %s73 = sadd.s32 %s72, 1
      %p76 = scmp.eq.s32.totalorder %s17, 1
      %p77 = scmp.ne.s32.totalorder %s72, %s74
      %p78 = scmp.eq.s32.totalorder %s17, 0
      %p79 = por %p77, %p78
      %p80 = scmp.ne.s32.totalorder %s72, %s74
      %p81 = scmp.eq.s32.totalorder %s22, 1
      %p82 = por %p80, %p81
      %p83 = scmp.ne.s32.totalorder %s74, %s75
      %p84 = scmp.eq.s32.totalorder %s22, 0
      %p85 = por %p83, %p84
      %p86 = scmp.ne.s32.totalorder %s74, %s75
      %p87 = scmp.eq.s32.totalorder %s23, 1
      %p88 = por %p86, %p87
      %p90 = scmp.ne.s32.totalorder %s75, %s89
      %p91 = scmp.eq.s32.totalorder %s23, 0
      %p92 = por %p90, %p91
      %s94 = sadd.s32 %s93, 1
      %p97 = scmp.eq.s32.totalorder %s17, 1
      %p98 = scmp.ne.s32.totalorder %s93, %s95
      %p99 = scmp.eq.s32.totalorder %s17, 0
      %p100 = por %p98, %p99
      %p101 = scmp.ne.s32.totalorder %s93, %s95
      %p102 = scmp.eq.s32.totalorder %s22, 1
      %p103 = por %p101, %p102
      %p104 = scmp.ne.s32.totalorder %s95, %s96
      %p105 = scmp.eq.s32.totalorder %s22, 0
      %p106 = por %p104, %p105
      %p107 = scmp.ne.s32.totalorder %s95, %s96
      %p108 = scmp.eq.s32.totalorder %s23, 1
      %p109 = por %p107, %p108
      %p111 = scmp.ne.s32.totalorder %s96, %s110
      %p112 = scmp.eq.s32.totalorder %s23, 0
      %p113 = por %p111, %p112
      %s115 = sadd.s32 %s114, 1
      %p118 = scmp.eq.s32.totalorder %s17, 1
      %p119 = scmp.ne.s32.totalorder %s114, %s116
      %p120 = scmp.eq.s32.totalorder %s17, 0
      %p121 = por %p119, %p120
      %p122 = scmp.ne.s32.totalorder %s114, %s116
      %p123 = scmp.eq.s32.totalorder %s22, 1
      %p124 = por %p122, %p123
      %p125 = scmp.ne.s32.totalorder %s116, %s117
      %p126 = scmp.eq.s32.totalorder %s22, 0
      %p127 = por %p125, %p126
      %p128 = scmp.ne.s32.totalorder %s116, %s117
      %p129 = scmp.eq.s32.totalorder %s23, 1
      %p130 = por %p128, %p129
      %p132 = scmp.ne.s32.totalorder %s117, %s131
      %p133 = scmp.eq.s32.totalorder %s23, 0
      %p134 = por %p132, %p133
      %s135 = ssub.s32 %s17, %s24
      %p136 = scmp.eq.s32.totalorder %s135, 0
      %s138 = sadd.s32 %s137, 1
      %s139 = scalar_select %p136, %s137, %s138
      %p142 = pneg %p136
      %p143 = scmp.eq.s32.totalorder %s17, 1
      %p144 = por %p142, %p143
      %p145 = scmp.ne.s32.totalorder %s137, %s140
      %p146 = scmp.eq.s32.totalorder %s17, 0
      %p147 = por %p145, %p146
      %p148 = scmp.ne.s32.totalorder %s137, %s140
      %p149 = scmp.eq.s32.totalorder %s22, 1
      %p150 = por %p148, %p149
      %p151 = scmp.ne.s32.totalorder %s140, %s141
      %p152 = scmp.eq.s32.totalorder %s22, 0
      %p153 = por %p151, %p152
      %p154 = scmp.ne.s32.totalorder %s140, %s141
      %p155 = scmp.eq.s32.totalorder %s23, 1
      %p156 = por %p154, %p155
      %p158 = scmp.ne.s32.totalorder %s141, %s157
      %p159 = scmp.eq.s32.totalorder %s23, 0
      %p160 = por %p158, %p159
      %p161 = scmp.le.s32.totalorder 1, %s17
      %p162 = scmp.lt.s32.totalorder %s17, 3
      %p163 = pnand %p161, %p162
      %p164 = pneg %p163
      // Predicated region
      $region9: #{tpu_custom_call.1} parent=5 // pred_check
        _
      $region10: #{tpu_custom_call.1} parent=5 // pred_check_branch
        %166 = sbr.rel (%p163) target = $region12
      $region11: #{tpu_custom_call.1} parent=5 // pred_region
        %s167 = ssub.s32 %s17, 1
        // Predicated region
        $region13: #{tpu_custom_call.1} parent=11 // pred_check
          %p168 = pneg %p64
        $region14: #{tpu_custom_call.1} parent=11 // pred_check_branch
          %170 = sbr.rel (%p168) target = $region16
        $region15: #{tpu_custom_call.1} parent=11 // pred_region
          _
        $region16: #{tpu_custom_call.1} parent=11 // pred_fallthru
          _
        // Predicated region
        $region17: #{tpu_custom_call.1} parent=11 // pred_check
          %p171 = pneg %p85
        $region18: #{tpu_custom_call.1} parent=11 // pred_check_branch
          %173 = sbr.rel (%p171) target = $region20
        $region19: #{tpu_custom_call.1} parent=11 // pred_region
          _
        $region20: #{tpu_custom_call.1} parent=11 // pred_fallthru
          _
        // Predicated region
        $region21: #{tpu_custom_call.1} parent=11 // pred_check
          %p174 = pneg %p106
        $region22: #{tpu_custom_call.1} parent=11 // pred_check_branch
          %176 = sbr.rel (%p174) target = $region24
        $region23: #{tpu_custom_call.1} parent=11 // pred_region
          _
        $region24: #{tpu_custom_call.1} parent=11 // pred_fallthru
          _
        // Predicated region
        $region25: #{tpu_custom_call.1} parent=11 // pred_check
          %p177 = pneg %p127
        $region26: #{tpu_custom_call.1} parent=11 // pred_check_branch
          %179 = sbr.rel (%p177) target = $region28
        $region27: #{tpu_custom_call.1} parent=11 // pred_region
          _
        $region28: #{tpu_custom_call.1} parent=11 // pred_fallthru
          _
      $region12: #{tpu_custom_call.1} parent=5 // pred_fallthru
        _
      %p180 = scmp.lt.s32.totalorder %s17, 2
      // Predicated region
      $region29: #{tpu_custom_call.1} parent=5 // pred_check
        %p181 = pneg %p180
      $region30: #{tpu_custom_call.1} parent=5 // pred_check_branch
        %183 = sbr.rel (%p181) target = $region32
      $region31: #{tpu_custom_call.1} parent=5 // pred_region
        // Predicated region
        $region33: #{tpu_custom_call.1} parent=31 // pred_check
          %p184 = pneg %p37
        $region34: #{tpu_custom_call.1} parent=31 // pred_check_branch
          %186 = sbr.rel (%p184) target = $region36
        $region35: #{tpu_custom_call.1} parent=31 // pred_region
          %s187 = sand.u32 %s27, 1
          %s188 = scalar_lea.sflag [#allocation3], %s187
          %s189 = sand.u32 %s27, 1
          %s190 = smul.addr %s189, 64
          %s191 = scalar_lea.vmem [#allocation2], %s190
          %193 = vsyncadd %s188, 0
          %s194 = smul.addr %s17, 8
          %s195 = smul.addr %s194, 8
          %s196 = scalar_lea.hbm %s0, %s195
          %s197 = sshll.u32 %s196, 4
          %s198 = int_to_ptr.hbm [resolvable:$true] %s197
          %s199 = sshll.u32 %s191, 4
          %s200 = int_to_ptr.vmem [resolvable:$true] %s199
          %205 = dma.hbm_to_vmem [thread:$0]  %s198, 1024, %s200, %s188, 256, 256, 16
        $region36: #{tpu_custom_call.1} parent=31 // pred_fallthru
          _
      $region32: #{tpu_custom_call.1} parent=5 // pred_fallthru
        _
      %p206 = scmp.le.s32.totalorder 1, %s17
      %p207 = scmp.lt.s32.totalorder %s17, 3
      %p208 = pnand %p206, %p207
      %p209 = pneg %p208
      // Predicated region
      $region37: #{tpu_custom_call.1} parent=5 // pred_check
        _
      $region38: #{tpu_custom_call.1} parent=5 // pred_check_branch
        %211 = sbr.rel (%p208) target = $region40
      $region39: #{tpu_custom_call.1} parent=5 // pred_region
        %s212 = ssub.s32 %s17, 1
        %s213 = sand.u32 %s30, 1
        %s214 = scalar_lea.sflag [#allocation3], %s213
        %s215 = sand.u32 %s30, 1
        %s216 = smul.addr %s215, 64
        %s217 = scalar_lea.vmem [#allocation2], %s216
        // Predicated region
        $region41: #{tpu_custom_call.1} parent=39 // pred_check
          %p218 = pneg %p43
        $region42: #{tpu_custom_call.1} parent=39 // pred_check_branch
          %220 = sbr.rel (%p218) target = $region44
        $region43: #{tpu_custom_call.1} parent=39 // pred_region
          %222 = dma.done %s214, 1024
        $region44: #{tpu_custom_call.1} parent=39 // pred_fallthru
          _
        %s223 = sand.u32 %s30, 1
        %s224 = scalar_lea.sflag [#allocation3], %s223
        %s225 = sand.u32 %s30, 1
        %s226 = smul.addr %s225, 64
        %s227 = scalar_lea.vmem [#allocation2], %s226
        %p228 = pneg %p43
        %p229 = pneg %p40
        %p230 = pneg %p64
        %p231 = pneg %p61
        %p232 = pneg %p85
        %p233 = pneg %p82
        %p234 = pneg %p106
        %p235 = pneg %p103
        %p236 = pneg %p127
        %p237 = pneg %p124
        %p238 = pneg %p153
        %p239 = pneg %p150
        %s240 = sand.u32 %s140, 1
        %s241 = scalar_lea.sflag [#allocation4], %s240
        %s242 = sand.u32 %s140, 1
        %s243 = smul.addr %s242, 64
        %s244 = scalar_lea.vmem [#allocation5], %s243
        %v245 = vld [vmem:[%s217] sm:$0xff]
        %v246 = vld [vmem:[%s217 + $0x8] sm:$0xff]
        %v247 = vld [vmem:[%s217 + $0x10] sm:$0xff]
        %v248 = vld [vmem:[%s217 + $0x18] sm:$0xff]
        %v249 = vld [vmem:[%s217 + $0x20] sm:$0xff]
        %v250 = vld [vmem:[%s217 + $0x28] sm:$0xff]
        %v251 = vld [vmem:[%s217 + $0x30] sm:$0xff]
        %v252 = vld [vmem:[%s217 + $0x38] sm:$0xff]
        %v253 = vadd.f32 %v245, %v246
        %v254 = vadd.f32 %v247, %v248
        %v255 = vadd.f32 %v249, %v250
        %v256 = vadd.f32 %v251, %v252
        %257 = vadd.xlane.f32.xlu0 %v253
        %v258 = vpop.xlane.xlu0 %257
        %259 = vadd.xlane.f32.xlu0 %v254
        %v260 = vpop.xlane.xlu0 %259
        %261 = vadd.xlane.f32.xlu0 %v255
        %v262 = vpop.xlane.xlu0 %261
        %263 = vadd.xlane.f32.xlu0 %v256
        %v264 = vpop.xlane.xlu0 %263
        %v265 = vmul.f32 %v258, 0.00390625
        %v266 = vmul.f32 %v260, 0.00390625
        %v267 = vmul.f32 %v262, 0.00390625
        %v268 = vmul.f32 %v264, 0.00390625
        %v269 = vld [vmem:[%s1] sm:$0xff]
        %v270 = vld [vmem:[%s1 + $0x8] sm:$0xff]
        %v271 = vld [vmem:[%s1 + $0x10] sm:$0xff]
        %v272 = vld [vmem:[%s1 + $0x18] sm:$0xff]
        %v273 = vmul.f32 %v269, %v265
        %v274 = vmul.f32 %v270, %v266
        %v275 = vmul.f32 %v271, %v267
        %v276 = vmul.f32 %v272, %v268
        %vm277 = vcmask 31744
        %v278 = vsel %vm277, %v273, 0.0
        %v279 = vsel %vm277, %v274, 0.0
        %v280 = vadd.f32 %v278, %v279
        %v281 = vsel %vm277, %v275, 0.0
        %v282 = vadd.f32 %v280, %v281
        %v283 = vsel %vm277, %v276, 0.0
        %v284 = vadd.f32 %v282, %v283
        %v285 = vrot.slane %v284, 4
        %v286 = vadd.f32 %v284, %v285
        %v287 = vrot.slane %v286, 2
        %v288 = vadd.f32 %v286, %v287
        %v289 = vrot.slane %v288, 1
        %v290 = vadd.f32 %v288, %v289
        %v291 = vld [vmem:[%s2] sm:$0x1]
        %v292 = vadd.f32 %v290, %v291
        %v293 = vmax.f32 %v292, 0.0
        %v294 = vld [vmem:[%s3] sm:$0xff]
        %v295 = vld [vmem:[%s3 + $0x8] sm:$0xff]
        %v296 = vld [vmem:[%s3 + $0x10] sm:$0xff]
        %v297 = vld [vmem:[%s3 + $0x18] sm:$0xff]
        %v298 = vperm.slane %v293, 0
        %v299 = vmul.f32 %v294, %v298
        %v300 = vmul.f32 %v295, %v298
        %v301 = vmul.f32 %v296, %v298
        %v302 = vmul.f32 %v297, %v298
        %v303 = vsel %vm277, %v299, 0.0
        %304 = vadd.xlane.f32.xlu0 %v303
        %v305 = vpop.xlane.xlu0 %304
        %v306 = vsel %vm277, %v300, 0.0
        %307 = vadd.xlane.f32.xlu0 %v306
        %v308 = vpop.xlane.xlu0 %307
        %v309 = vsel %vm277, %v301, 0.0
        %310 = vadd.xlane.f32.xlu0 %v309
        %v311 = vpop.xlane.xlu0 %310
        %v312 = vsel %vm277, %v302, 0.0
        %313 = vadd.xlane.f32.xlu0 %v312
        %v314 = vpop.xlane.xlu0 %313
        %v315 = vld [vmem:[%s4] sm:$0xff]
        %v316 = vld [vmem:[%s4 + $0x8] sm:$0xff]
        %v317 = vld [vmem:[%s4 + $0x10] sm:$0xff]
        %v318 = vld [vmem:[%s4 + $0x18] sm:$0xff]
        %v319 = vadd.f32 %v305, %v315
        %v320 = vadd.f32 %v308, %v316
        %v321 = vadd.f32 %v311, %v317
        %v322 = vadd.f32 %v314, %v318
        %v323 = vxor.u32 %v319, 2147483648
        %v324 = vxor.u32 %v320, 2147483648
        %v325 = vxor.u32 %v321, 2147483648
        %v326 = vxor.u32 %v322, 2147483648
        %v327 = vmul.f32 %v323, 1.442695
        %v328 = vpow.pop %v327
        %v329 = vmul.f32 %v324, 1.442695
        %v330 = vpow.pop %v329
        %v331 = vmul.f32 %v325, 1.442695
        %v332 = vpow.pop %v331
        %v333 = vmul.f32 %v326, 1.442695
        %v334 = vpow.pop %v333
        %v335 = vadd.f32 %v328, 1.0
        %v336 = vadd.f32 %v330, 1.0
        %v337 = vadd.f32 %v332, 1.0
        %v338 = vadd.f32 %v334, 1.0
        %v339 = vrcp.pop %v335
        %v340 = vmul.f32 %v335, %v339
        %v341 = vsub.f32 1.0, %v340
        %v342 = vmul.f32 %v339, %v341
        %v343 = vadd.f32 %v339, %v342
        %vm344 = vweird.f32 %v335
        %vm345 = vweird.f32 %v339
        %vm346 = vmor %vm344, %vm345
        %v347 = vsel %vm346, %v339, %v343
        %v348 = vand.u32 2147483647, %v335
        %vm349 = vcmp.eq.f32.partialorder %v348, 8.507059e+37
        %v350 = vand.u32 %v335, 2147483648
        %v351 = vor.u32 1.1754944e-38, %v350
        %v352 = vsel %vm349, %v351, %v347
        %v353 = vmul.f32 1.0, %v352
        %v354 = vrcp.pop %v336
        %v355 = vmul.f32 %v336, %v354
        %v356 = vsub.f32 1.0, %v355
        %v357 = vmul.f32 %v354, %v356
        %v358 = vadd.f32 %v354, %v357
        %vm359 = vweird.f32 %v336
        %vm360 = vweird.f32 %v354
        %vm361 = vmor %vm359, %vm360
        %v362 = vsel %vm361, %v354, %v358
        %v363 = vand.u32 2147483647, %v336
        %vm364 = vcmp.eq.f32.partialorder %v363, 8.507059e+37
        %v365 = vand.u32 %v336, 2147483648
        %v366 = vor.u32 1.1754944e-38, %v365
        %v367 = vsel %vm364, %v366, %v362
        %v368 = vmul.f32 1.0, %v367
        %v369 = vrcp.pop %v337
        %v370 = vmul.f32 %v337, %v369
        %v371 = vsub.f32 1.0, %v370
        %v372 = vmul.f32 %v369, %v371
        %v373 = vadd.f32 %v369, %v372
        %vm374 = vweird.f32 %v337
        %vm375 = vweird.f32 %v369
        %vm376 = vmor %vm374, %vm375
        %v377 = vsel %vm376, %v369, %v373
        %v378 = vand.u32 2147483647, %v337
        %vm379 = vcmp.eq.f32.partialorder %v378, 8.507059e+37
        %v380 = vand.u32 %v337, 2147483648
        %v381 = vor.u32 1.1754944e-38, %v380
        %v382 = vsel %vm379, %v381, %v377
        %v383 = vmul.f32 1.0, %v382
        %v384 = vrcp.pop %v338
        %v385 = vmul.f32 %v338, %v384
        %v386 = vsub.f32 1.0, %v385
        %v387 = vmul.f32 %v384, %v386
        %v388 = vadd.f32 %v384, %v387
        %vm389 = vweird.f32 %v338
        %vm390 = vweird.f32 %v384
        %vm391 = vmor %vm389, %vm390
        %v392 = vsel %vm391, %v384, %v388
        %v393 = vand.u32 2147483647, %v338
        %vm394 = vcmp.eq.f32.partialorder %v393, 8.507059e+37
        %v395 = vand.u32 %v338, 2147483648
        %v396 = vor.u32 1.1754944e-38, %v395
        %v397 = vsel %vm394, %v396, %v392
        %v398 = vmul.f32 1.0, %v397
        %400 = vset.pattern.permute.xlu0 0
        %401 = vperm.xlu0 %400, %v353
        %v402 = vpop.permute.xlu0 %401
        %405 = vset.pattern.permute.xlu0 0
        %406 = vperm.xlu0 %405, %v368
        %v407 = vpop.permute.xlu0 %406
        %410 = vset.pattern.permute.xlu0 0
        %411 = vperm.xlu0 %410, %v383
        %v412 = vpop.permute.xlu0 %411
        %415 = vset.pattern.permute.xlu0 0
        %416 = vperm.xlu0 %415, %v398
        %v417 = vpop.permute.xlu0 %416
        %v419 = vmul.f32 %v245, %v402
        %v420 = vmul.f32 %v246, %v402
        %v421 = vmul.f32 %v247, %v407
        %v422 = vmul.f32 %v248, %v407
        %v423 = vmul.f32 %v249, %v412
        %v424 = vmul.f32 %v250, %v412
        %v425 = vmul.f32 %v251, %v417
        %v426 = vmul.f32 %v252, %v417
        %427 = vst [vmem:[%s244] sm:$0xff] %v419
        %428 = vst [vmem:[%s244 + $0x8] sm:$0xff] %v420
        %429 = vst [vmem:[%s244 + $0x10] sm:$0xff] %v421
        %430 = vst [vmem:[%s244 + $0x18] sm:$0xff] %v422
        %431 = vst [vmem:[%s244 + $0x20] sm:$0xff] %v423
        %432 = vst [vmem:[%s244 + $0x28] sm:$0xff] %v424
        %433 = vst [vmem:[%s244 + $0x30] sm:$0xff] %v425
        %434 = vst [vmem:[%s244 + $0x38] sm:$0xff] %v426
        %s435 = sand.u32 %s140, 1
        %s436 = scalar_lea.sflag [#allocation4], %s435
        %s437 = sand.u32 %s140, 1
        %s438 = smul.addr %s437, 64
        %s439 = scalar_lea.vmem [#allocation5], %s438
        // Predicated region
        $region45: #{tpu_custom_call.1} parent=39 // pred_check
          %p440 = pneg %p150
        $region46: #{tpu_custom_call.1} parent=39 // pred_check_branch
          %442 = sbr.rel (%p440) target = $region48
        $region47: #{tpu_custom_call.1} parent=39 // pred_region
          %444 = vsyncadd %s436, 0
          %s445 = smul.addr %s22, 8
          %s446 = smul.addr %s445, 8
          %s447 = scalar_lea.hbm %s5, %s446
          %s448 = sshll.u32 %s439, 4
          %s449 = int_to_ptr.vmem [resolvable:$true] %s448
          %s450 = sshll.u32 %s447, 4
          %s451 = int_to_ptr.hbm [resolvable:$true] %s450
          %456 = dma.vmem_to_hbm [thread:$0]  %s449, 1024, %s451, %s436, 256, 256, 16
        $region48: #{tpu_custom_call.1} parent=39 // pred_fallthru
          _
      $region40: #{tpu_custom_call.1} parent=5 // pred_fallthru
        _
      %p457 = scmp.le.s32.totalorder 2, %s17
      // Predicated region
      $region49: #{tpu_custom_call.1} parent=5 // pred_check
        %p458 = pneg %p457
      $region50: #{tpu_custom_call.1} parent=5 // pred_check_branch
        %460 = sbr.rel (%p458) target = $region52
      $region51: #{tpu_custom_call.1} parent=5 // pred_region
        %s461 = ssub.s32 %s17, 2
        // Predicated region
        $region53: #{tpu_custom_call.1} parent=51 // pred_check
          %p462 = pneg %p156
        $region54: #{tpu_custom_call.1} parent=51 // pred_check_branch
          %464 = sbr.rel (%p462) target = $region56
        $region55: #{tpu_custom_call.1} parent=51 // pred_region
          %s465 = sand.u32 %s141, 1
          %s466 = scalar_lea.sflag [#allocation4], %s465
          %s467 = sand.u32 %s141, 1
          %s468 = smul.addr %s467, 64
          %s469 = scalar_lea.vmem [#allocation5], %s468
          %471 = dma.done %s466, 1024
        $region56: #{tpu_custom_call.1} parent=51 // pred_fallthru
          _
      $region52: #{tpu_custom_call.1} parent=5 // pred_fallthru
        _
    $region6: #{tpu_custom_call.1} parent=1 // loop_footer
      %s21 = sadd.s32 1, %s17
    $region7: #{tpu_custom_call.1} parent=1 // loop_footer_branch
      %16 = sbr.rel target = $region3
    $region8: #{tpu_custom_call.1} parent=1 // loop_exit
      _
    %472 = vsyncpa [#allocation3], 1
    %s473 = scalar_lea.sflag [#allocation3], 1
    %474 = vsyncpa %s473, 1
    %475 = vsyncpa [#allocation4], 1
    %s476 = scalar_lea.sflag [#allocation4], 1
    %477 = vsyncpa %s476, 1

</llo_original>
